<compile_context>
chip_gen: v6e
topology: v6e:2x2x1
jax: 0.10.0
libtpu: 0.0.40
codegen_flags: <defaults>
</compile_context>

<pallas_src>
import jax
import jax.numpy as jnp
from jax.experimental import pallas as pl
from jax.experimental.pallas import tpu as pltpu

_ROW = 1024        # lane-dense row width (multiple of 128 lanes)
_TILE_ROWS = 512   # rows per grid step -> 512*1024*4 B = 2 MiB f32 tile


def _relu_kernel(x_ref, o_ref):
    # Pure VPU elementwise max against scalar zero on the whole VMEM tile.
    o_ref[...] = jnp.maximum(x_ref[...], 0.0)


def _relu_pallas_slab(slab: jax.Array) -> jax.Array:
    """ReLU over a lane-dense 2-D slab of shape (rows, _ROW)."""
    rows, row_w = slab.shape
    # Full-extent block for small inputs (no (8,128) constraint when the block
    # equals the array dim); otherwise fixed (512, 1024) tiles over a cdiv grid
    # (boundary block is handled by Pallas' clipped reads/writes — safe for an
    # elementwise op).
    tile_rows = min(_TILE_ROWS, rows)
    grid = (pl.cdiv(rows, tile_rows),)

    return pl.pallas_call(
        _relu_kernel,
        out_shape=jax.ShapeDtypeStruct(slab.shape, slab.dtype),
        grid=grid,
        in_specs=[pl.BlockSpec((tile_rows, row_w), lambda i: (i, 0))],
        out_specs=pl.BlockSpec((tile_rows, row_w), lambda i: (i, 0)),
        input_output_aliases={0: 0},
        compiler_params=pltpu.CompilerParams(
            dimension_semantics=("parallel",),
        ),
    )(slab)


def relu(x: jax.Array, *, force_pallas: bool = False,
         min_pallas_bytes: int = 1 << 20) -> jax.Array:
    """ReLU matching M.forward (nn.ReLU(inplace=True)) semantics.

    Small tensors default to plain jnp.maximum so XLA can fuse the ReLU into
    its producer/consumer instead of paying custom-call overhead; larger
    tensors (or force_pallas=True) take the tiled Pallas path.
    """
    if not force_pallas and x.size * x.dtype.itemsize < min_pallas_bytes:
        return jnp.maximum(x, 0)

    orig_shape = x.shape
    total = x.size
    flat = x.reshape(-1)
    padded_total = pl.cdiv(total, _ROW) * _ROW
    if padded_total != total:
        flat = jnp.pad(flat, (0, padded_total - total))
    slab = flat.reshape(padded_total // _ROW, _ROW)

    out = _relu_pallas_slab(slab)
    return out.reshape(-1)[:total].reshape(orig_shape)


if __name__ == "__main__":
    key = jax.random.PRNGKey(0)
    # Same shape as the reference module's input: [1, 432, 14, 14]
    x151 = jax.random.normal(key, (1, 432, 14, 14), dtype=jnp.float32)

    # Force the Pallas path so the kernel itself is compiled and run on TPU.
    x152 = relu(x151, force_pallas=True)
    jax.block_until_ready(x152)

    ref = jnp.maximum(x151, 0.0)
    assert x152.shape == x151.shape
    assert x152.dtype == x151.dtype
    assert jnp.array_equal(x152, ref), "mismatch vs reference ReLU (pallas path)"

    # Default wrapper (small-tensor fallback) must agree as well.
    x152_default = relu(x151)
    assert jnp.array_equal(x152_default, ref), "mismatch vs reference ReLU (fallback path)"

    print("KERNEL_OK")
</pallas_src>

<mosaic_0001>
module attributes {stable_mosaic.version = 11 : i64} {
  func.func @_relu_kernel(%arg0: i32, %arg1: memref<83x1024xf32, #tpu.memory_space<vmem>>, %arg2: memref<83x1024xf32, #tpu.memory_space<vmem>>) attributes {dimension_semantics = [#tpu.dimension_semantics<parallel>], iteration_bounds = array<i64: 1>, scalar_prefetch = 0 : i64, scratch_operands = 0 : i64, tpu.core_type = #tpu.core_type<tc>, window_params = [{transform_indices = @transform_0, window_bounds = array<i64: 83, 1024>}, {transform_indices = @transform_1, window_bounds = array<i64: 83, 1024>}]} {
    %c0 = arith.constant 0 : index
    %c0_0 = arith.constant 0 : index
    %0 = vector.load %arg1[%c0, %c0_0] : memref<83x1024xf32, #tpu.memory_space<vmem>>, vector<83x1024xf32>
    %cst = arith.constant 0.000000e+00 : f32
    %1 = vector.broadcast %cst : f32 to vector<83x1024xf32>
    %2 = arith.maximumf %0, %1 : vector<83x1024xf32>
    %c0_1 = arith.constant 0 : index
    %c0_2 = arith.constant 0 : index
    %3 = vector.load %arg2[%c0_1, %c0_2] : memref<83x1024xf32, #tpu.memory_space<vmem>>, vector<83x1024xf32>
    tpu.vector_store %arg2[%c0_1, %c0_2], %2 {strides = array<i32>} : memref<83x1024xf32, #tpu.memory_space<vmem>>, vector<83x1024xf32>,
    return
  }
  func.func @transform_0(%arg0: i32) -> (i32, i32) {
    %c0_i32 = arith.constant 0 : i32
    %c0_i32_0 = arith.constant 0 : i32
    return %arg0, %c0_i32 : i32, i32
  }
  func.func @transform_1(%arg0: i32) -> (i32, i32) {
    %c0_i32 = arith.constant 0 : i32
    %c0_i32_0 = arith.constant 0 : i32
    return %arg0, %c0_i32 : i32, i32
  }
}

</mosaic_0001>

<llo_original>
// kernel: tpu_custom_call.1
$region0: #{tpu_custom_call.1}
  #allocation0 [shape = 'u32[]', space=smem, size = 0x4, offset = 0x4, fixed_abs, tag = 'smem constant byte address 0x4 - core index']
  #allocation1 [shape = 'u32[144,128]{1,0:T(1,128)}', space=vmem, size = 0x12000, scoped, tag = 'internal scratch']
  %s0 = inlined_call_operand.hbm [shape: f32[83,1024], index: 0, kind: input, shape index: {}, may-alias: {0,1}]
  %s1 = inlined_call_operand.hbm [shape: f32[83,1024], index: 1, kind: output, shape index: {}, may-alias: {0,1}]
  %s2 = sld [smem:[#allocation0]]
  $region18: #{tpu_custom_call.1} parent=0
    _
  %s4 = ssub.s32 1, %s2
  %s5 = scalar_select 0, %s4, %s2
  $region1: #{tpu_custom_call.1} parent=0
    #allocation2 [shape = 'u8[360448]{0}', space=vmem, size = 0x58000, scoped, tag = 'input window, operand 0, single buffered']
    #allocation3 [shape = 's32[1]{0}', space=sflag, size = 0x4, scoped, tag = 'scoped memory for tpu_custom_call.1']
    #allocation4 [shape = 's32[1]{0}', space=sflag, size = 0x4, scoped, tag = 'scoped memory for tpu_custom_call.1']
    #allocation5 [shape = 'u8[360448]{0}', space=vmem, size = 0x58000, scoped, tag = 'output window, operand 0, single buffered']
    %6 = vsyncpa [#allocation3], 0
    %7 = vsyncpa [#allocation4], 0
    // Predicated region
    $region2: #{tpu_custom_call.1} parent=1 // pred_check
      _
    $region3: #{tpu_custom_call.1} parent=1 // pred_check_branch
      %9 = sbr.rel (0) target = $region5
    $region4: #{tpu_custom_call.1} parent=1 // pred_region
      %s11 = ssub.s32 11264, 11264
      %12 = vsyncadd [#allocation3], %s11
      %s13 = sshll.u32 [#allocation2], 4
      %s14 = int_to_ptr.vmem [resolvable:$true] %s13
      %19 = dma.hbm_to_vmem [thread:$0]  %s0, 11264, %s14, [#allocation3], 1024, 1024, 64
    $region5: #{tpu_custom_call.1} parent=1 // pred_fallthru
      _
    // Predicated region
    $region6: #{tpu_custom_call.1} parent=1 // pred_check
      _
    $region7: #{tpu_custom_call.1} parent=1 // pred_check_branch
      %21 = sbr.rel (0) target = $region9
    $region8: #{tpu_custom_call.1} parent=1 // pred_region
      %22 = dma.done [#allocation3], 11264
    $region9: #{tpu_custom_call.1} parent=1 // pred_fallthru
      _
    %v23 = vld [vmem:[#allocation2] sm:$0xff]
    %v24 = vld [vmem:[#allocation2 + $0x8] sm:$0xff]
    %v25 = vld [vmem:[#allocation2 + $0x10] sm:$0xff]
    %v26 = vld [vmem:[#allocation2 + $0x18] sm:$0xff]
    %v27 = vld [vmem:[#allocation2 + $0x20] sm:$0xff]
    %v28 = vld [vmem:[#allocation2 + $0x28] sm:$0xff]
    %v29 = vld [vmem:[#allocation2 + $0x30] sm:$0xff]
    %v30 = vld [vmem:[#allocation2 + $0x38] sm:$0xff]
    %v31 = vld [vmem:[#allocation2 + $0x40] sm:$0xff]
    %v32 = vld [vmem:[#allocation2 + $0x48] sm:$0xff]
    %v33 = vld [vmem:[#allocation2 + $0x50] sm:$0xff]
    %v34 = vld [vmem:[#allocation2 + $0x58] sm:$0xff]
    %v35 = vld [vmem:[#allocation2 + $0x60] sm:$0xff]
    %v36 = vld [vmem:[#allocation2 + $0x68] sm:$0xff]
    %v37 = vld [vmem:[#allocation2 + $0x70] sm:$0xff]
    %v38 = vld [vmem:[#allocation2 + $0x78] sm:$0xff]
    %v39 = vld [vmem:[#allocation2 + $0x80] sm:$0xff]
    %v40 = vld [vmem:[#allocation2 + $0x88] sm:$0xff]
    %v41 = vld [vmem:[#allocation2 + $0x90] sm:$0xff]
    %v42 = vld [vmem:[#allocation2 + $0x98] sm:$0xff]
    %v43 = vld [vmem:[#allocation2 + $0xa0] sm:$0xff]
    %v44 = vld [vmem:[#allocation2 + $0xa8] sm:$0xff]
    %v45 = vld [vmem:[#allocation2 + $0xb0] sm:$0xff]
    %v46 = vld [vmem:[#allocation2 + $0xb8] sm:$0xff]
    %v47 = vld [vmem:[#allocation2 + $0xc0] sm:$0xff]
    %v48 = vld [vmem:[#allocation2 + $0xc8] sm:$0xff]
    %v49 = vld [vmem:[#allocation2 + $0xd0] sm:$0xff]
    %v50 = vld [vmem:[#allocation2 + $0xd8] sm:$0xff]
    %v51 = vld [vmem:[#allocation2 + $0xe0] sm:$0xff]
    %v52 = vld [vmem:[#allocation2 + $0xe8] sm:$0xff]
    %v53 = vld [vmem:[#allocation2 + $0xf0] sm:$0xff]
    %v54 = vld [vmem:[#allocation2 + $0xf8] sm:$0xff]
    %v55 = vld [vmem:[#allocation2 + $0x100] sm:$0xff]
    %v56 = vld [vmem:[#allocation2 + $0x108] sm:$0xff]
    %v57 = vld [vmem:[#allocation2 + $0x110] sm:$0xff]
    %v58 = vld [vmem:[#allocation2 + $0x118] sm:$0xff]
    %v59 = vld [vmem:[#allocation2 + $0x120] sm:$0xff]
    %v60 = vld [vmem:[#allocation2 + $0x128] sm:$0xff]
    %v61 = vld [vmem:[#allocation2 + $0x130] sm:$0xff]
    %v62 = vld [vmem:[#allocation2 + $0x138] sm:$0xff]
    %v63 = vld [vmem:[#allocation2 + $0x140] sm:$0xff]
    %v64 = vld [vmem:[#allocation2 + $0x148] sm:$0xff]
    %v65 = vld [vmem:[#allocation2 + $0x150] sm:$0xff]
    %v66 = vld [vmem:[#allocation2 + $0x158] sm:$0xff]
    %v67 = vld [vmem:[#allocation2 + $0x160] sm:$0xff]
    %v68 = vld [vmem:[#allocation2 + $0x168] sm:$0xff]
    %v69 = vld [vmem:[#allocation2 + $0x170] sm:$0xff]
    %v70 = vld [vmem:[#allocation2 + $0x178] sm:$0xff]
    %v71 = vld [vmem:[#allocation2 + $0x180] sm:$0xff]
    %v72 = vld [vmem:[#allocation2 + $0x188] sm:$0xff]
    %v73 = vld [vmem:[#allocation2 + $0x190] sm:$0xff]
    %v74 = vld [vmem:[#allocation2 + $0x198] sm:$0xff]
    %v75 = vld [vmem:[#allocation2 + $0x1a0] sm:$0xff]
    %v76 = vld [vmem:[#allocation2 + $0x1a8] sm:$0xff]
    %v77 = vld [vmem:[#allocation2 + $0x1b0] sm:$0xff]
    %v78 = vld [vmem:[#allocation2 + $0x1b8] sm:$0xff]
    %v79 = vld [vmem:[#allocation2 + $0x1c0] sm:$0xff]
    %v80 = vld [vmem:[#allocation2 + $0x1c8] sm:$0xff]
    %v81 = vld [vmem:[#allocation2 + $0x1d0] sm:$0xff]
    %v82 = vld [vmem:[#allocation2 + $0x1d8] sm:$0xff]
    %v83 = vld [vmem:[#allocation2 + $0x1e0] sm:$0xff]
    %v84 = vld [vmem:[#allocation2 + $0x1e8] sm:$0xff]
    %v85 = vld [vmem:[#allocation2 + $0x1f0] sm:$0xff]
    %v86 = vld [vmem:[#allocation2 + $0x1f8] sm:$0xff]
    %v87 = vld [vmem:[#allocation2 + $0x200] sm:$0xff]
    %v88 = vld [vmem:[#allocation2 + $0x208] sm:$0xff]
    %v89 = vld [vmem:[#allocation2 + $0x210] sm:$0xff]
    %v90 = vld [vmem:[#allocation2 + $0x218] sm:$0xff]
    %v91 = vld [vmem:[#allocation2 + $0x220] sm:$0xff]
    %v92 = vld [vmem:[#allocation2 + $0x228] sm:$0xff]
    %v93 = vld [vmem:[#allocation2 + $0x230] sm:$0xff]
    %v94 = vld [vmem:[#allocation2 + $0x238] sm:$0xff]
    %v95 = vld [vmem:[#allocation2 + $0x240] sm:$0xff]
    %v96 = vld [vmem:[#allocation2 + $0x248] sm:$0xff]
    %v97 = vld [vmem:[#allocation2 + $0x250] sm:$0xff]
    %v98 = vld [vmem:[#allocation2 + $0x258] sm:$0xff]
    %v99 = vld [vmem:[#allocation2 + $0x260] sm:$0xff]
    %v100 = vld [vmem:[#allocation2 + $0x268] sm:$0xff]
    %v101 = vld [vmem:[#allocation2 + $0x270] sm:$0xff]
    %v102 = vld [vmem:[#allocation2 + $0x278] sm:$0xff]
    %v103 = vld [vmem:[#allocation2 + $0x280] sm:$0x7]
    %v104 = vld [vmem:[#allocation2 + $0x288] sm:$0x7]
    %v105 = vld [vmem:[#allocation2 + $0x290] sm:$0x7]
    %v106 = vld [vmem:[#allocation2 + $0x298] sm:$0x7]
    %v107 = vld [vmem:[#allocation2 + $0x2a0] sm:$0x7]
    %v108 = vld [vmem:[#allocation2 + $0x2a8] sm:$0x7]
    %v109 = vld [vmem:[#allocation2 + $0x2b0] sm:$0x7]
    %v110 = vld [vmem:[#allocation2 + $0x2b8] sm:$0x7]
    %v111 = vmax.f32 %v23, 0.0
    %v112 = vmax.f32 %v24, 0.0
    %v113 = vmax.f32 %v25, 0.0
    %v114 = vmax.f32 %v26, 0.0
    %v115 = vmax.f32 %v27, 0.0
    %v116 = vmax.f32 %v28, 0.0
    %v117 = vmax.f32 %v29, 0.0
    %v118 = vmax.f32 %v30, 0.0
    %v119 = vmax.f32 %v31, 0.0
    %v120 = vmax.f32 %v32, 0.0
    %v121 = vmax.f32 %v33, 0.0
    %v122 = vmax.f32 %v34, 0.0
    %v123 = vmax.f32 %v35, 0.0
    %v124 = vmax.f32 %v36, 0.0
    %v125 = vmax.f32 %v37, 0.0
    %v126 = vmax.f32 %v38, 0.0
    %v127 = vmax.f32 %v39, 0.0
    %v128 = vmax.f32 %v40, 0.0
    %v129 = vmax.f32 %v41, 0.0
    %v130 = vmax.f32 %v42, 0.0
    %v131 = vmax.f32 %v43, 0.0
    %v132 = vmax.f32 %v44, 0.0
    %v133 = vmax.f32 %v45, 0.0
    %v134 = vmax.f32 %v46, 0.0
    %v135 = vmax.f32 %v47, 0.0
    %v136 = vmax.f32 %v48, 0.0
    %v137 = vmax.f32 %v49, 0.0
    %v138 = vmax.f32 %v50, 0.0
    %v139 = vmax.f32 %v51, 0.0
    %v140 = vmax.f32 %v52, 0.0
    %v141 = vmax.f32 %v53, 0.0
    %v142 = vmax.f32 %v54, 0.0
    %v143 = vmax.f32 %v55, 0.0
    %v144 = vmax.f32 %v56, 0.0
    %v145 = vmax.f32 %v57, 0.0
    %v146 = vmax.f32 %v58, 0.0
    %v147 = vmax.f32 %v59, 0.0
    %v148 = vmax.f32 %v60, 0.0
    %v149 = vmax.f32 %v61, 0.0
    %v150 = vmax.f32 %v62, 0.0
    %v151 = vmax.f32 %v63, 0.0
    %v152 = vmax.f32 %v64, 0.0
    %v153 = vmax.f32 %v65, 0.0
    %v154 = vmax.f32 %v66, 0.0
    %v155 = vmax.f32 %v67, 0.0
    %v156 = vmax.f32 %v68, 0.0
    %v157 = vmax.f32 %v69, 0.0
    %v158 = vmax.f32 %v70, 0.0
    %v159 = vmax.f32 %v71, 0.0
    %v160 = vmax.f32 %v72, 0.0
    %v161 = vmax.f32 %v73, 0.0
    %v162 = vmax.f32 %v74, 0.0
    %v163 = vmax.f32 %v75, 0.0
    %v164 = vmax.f32 %v76, 0.0
    %v165 = vmax.f32 %v77, 0.0
    %v166 = vmax.f32 %v78, 0.0
    %v167 = vmax.f32 %v79, 0.0
    %v168 = vmax.f32 %v80, 0.0
    %v169 = vmax.f32 %v81, 0.0
    %v170 = vmax.f32 %v82, 0.0
    %v171 = vmax.f32 %v83, 0.0
    %v172 = vmax.f32 %v84, 0.0
    %v173 = vmax.f32 %v85, 0.0
    %v174 = vmax.f32 %v86, 0.0
    %v175 = vmax.f32 %v87, 0.0
    %v176 = vmax.f32 %v88, 0.0
    %v177 = vmax.f32 %v89, 0.0
    %v178 = vmax.f32 %v90, 0.0
    %v179 = vmax.f32 %v91, 0.0
    %v180 = vmax.f32 %v92, 0.0
    %v181 = vmax.f32 %v93, 0.0
    %v182 = vmax.f32 %v94, 0.0
    %v183 = vmax.f32 %v95, 0.0
    %v184 = vmax.f32 %v96, 0.0
    %v185 = vmax.f32 %v97, 0.0
    %v186 = vmax.f32 %v98, 0.0
    %v187 = vmax.f32 %v99, 0.0
    %v188 = vmax.f32 %v100, 0.0
    %v189 = vmax.f32 %v101, 0.0
    %v190 = vmax.f32 %v102, 0.0
    %v191 = vmax.f32 %v103, 0.0
    %v192 = vmax.f32 %v104, 0.0
    %v193 = vmax.f32 %v105, 0.0
    %v194 = vmax.f32 %v106, 0.0
    %v195 = vmax.f32 %v107, 0.0
    %v196 = vmax.f32 %v108, 0.0
    %v197 = vmax.f32 %v109, 0.0
    %v198 = vmax.f32 %v110, 0.0
    %199 = vst [vmem:[#allocation5] sm:$0xff] %v111
    %200 = vst [vmem:[#allocation5 + $0x8] sm:$0xff] %v112
    %201 = vst [vmem:[#allocation5 + $0x10] sm:$0xff] %v113
    %202 = vst [vmem:[#allocation5 + $0x18] sm:$0xff] %v114
    %203 = vst [vmem:[#allocation5 + $0x20] sm:$0xff] %v115
    %204 = vst [vmem:[#allocation5 + $0x28] sm:$0xff] %v116
    %205 = vst [vmem:[#allocation5 + $0x30] sm:$0xff] %v117
    %206 = vst [vmem:[#allocation5 + $0x38] sm:$0xff] %v118
    %207 = vst [vmem:[#allocation5 + $0x40] sm:$0xff] %v119
    %208 = vst [vmem:[#allocation5 + $0x48] sm:$0xff] %v120
    %209 = vst [vmem:[#allocation5 + $0x50] sm:$0xff] %v121
    %210 = vst [vmem:[#allocation5 + $0x58] sm:$0xff] %v122
    %211 = vst [vmem:[#allocation5 + $0x60] sm:$0xff] %v123
    %212 = vst [vmem:[#allocation5 + $0x68] sm:$0xff] %v124
    %213 = vst [vmem:[#allocation5 + $0x70] sm:$0xff] %v125
    %214 = vst [vmem:[#allocation5 + $0x78] sm:$0xff] %v126
    %215 = vst [vmem:[#allocation5 + $0x80] sm:$0xff] %v127
    %216 = vst [vmem:[#allocation5 + $0x88] sm:$0xff] %v128
    %217 = vst [vmem:[#allocation5 + $0x90] sm:$0xff] %v129
    %218 = vst [vmem:[#allocation5 + $0x98] sm:$0xff] %v130
    %219 = vst [vmem:[#allocation5 + $0xa0] sm:$0xff] %v131
    %220 = vst [vmem:[#allocation5 + $0xa8] sm:$0xff] %v132
    %221 = vst [vmem:[#allocation5 + $0xb0] sm:$0xff] %v133
    %222 = vst [vmem:[#allocation5 + $0xb8] sm:$0xff] %v134
    %223 = vst [vmem:[#allocation5 + $0xc0] sm:$0xff] %v135
    %224 = vst [vmem:[#allocation5 + $0xc8] sm:$0xff] %v136
    %225 = vst [vmem:[#allocation5 + $0xd0] sm:$0xff] %v137
    %226 = vst [vmem:[#allocation5 + $0xd8] sm:$0xff] %v138
    %227 = vst [vmem:[#allocation5 + $0xe0] sm:$0xff] %v139
    %228 = vst [vmem:[#allocation5 + $0xe8] sm:$0xff] %v140
    %229 = vst [vmem:[#allocation5 + $0xf0] sm:$0xff] %v141
    %230 = vst [vmem:[#allocation5 + $0xf8] sm:$0xff] %v142
    %231 = vst [vmem:[#allocation5 + $0x100] sm:$0xff] %v143
    %232 = vst [vmem:[#allocation5 + $0x108] sm:$0xff] %v144
    %233 = vst [vmem:[#allocation5 + $0x110] sm:$0xff] %v145
    %234 = vst [vmem:[#allocation5 + $0x118] sm:$0xff] %v146
    %235 = vst [vmem:[#allocation5 + $0x120] sm:$0xff] %v147
    %236 = vst [vmem:[#allocation5 + $0x128] sm:$0xff] %v148
    %237 = vst [vmem:[#allocation5 + $0x130] sm:$0xff] %v149
    %238 = vst [vmem:[#allocation5 + $0x138] sm:$0xff] %v150
    %239 = vst [vmem:[#allocation5 + $0x140] sm:$0xff] %v151
    %240 = vst [vmem:[#allocation5 + $0x148] sm:$0xff] %v152
    %241 = vst [vmem:[#allocation5 + $0x150] sm:$0xff] %v153
    %242 = vst [vmem:[#allocation5 + $0x158] sm:$0xff] %v154
    %243 = vst [vmem:[#allocation5 + $0x160] sm:$0xff] %v155
    %244 = vst [vmem:[#allocation5 + $0x168] sm:$0xff] %v156
    %245 = vst [vmem:[#allocation5 + $0x170] sm:$0xff] %v157
    %246 = vst [vmem:[#allocation5 + $0x178] sm:$0xff] %v158
    %247 = vst [vmem:[#allocation5 + $0x180] sm:$0xff] %v159
    %248 = vst [vmem:[#allocation5 + $0x188] sm:$0xff] %v160
    %249 = vst [vmem:[#allocation5 + $0x190] sm:$0xff] %v161
    %250 = vst [vmem:[#allocation5 + $0x198] sm:$0xff] %v162
    %251 = vst [vmem:[#allocation5 + $0x1a0] sm:$0xff] %v163
    %252 = vst [vmem:[#allocation5 + $0x1a8] sm:$0xff] %v164
    %253 = vst [vmem:[#allocation5 + $0x1b0] sm:$0xff] %v165
    %254 = vst [vmem:[#allocation5 + $0x1b8] sm:$0xff] %v166
    %255 = vst [vmem:[#allocation5 + $0x1c0] sm:$0xff] %v167
    %256 = vst [vmem:[#allocation5 + $0x1c8] sm:$0xff] %v168
    %257 = vst [vmem:[#allocation5 + $0x1d0] sm:$0xff] %v169
    %258 = vst [vmem:[#allocation5 + $0x1d8] sm:$0xff] %v170
    %259 = vst [vmem:[#allocation5 + $0x1e0] sm:$0xff] %v171
    %260 = vst [vmem:[#allocation5 + $0x1e8] sm:$0xff] %v172
    %261 = vst [vmem:[#allocation5 + $0x1f0] sm:$0xff] %v173
    %262 = vst [vmem:[#allocation5 + $0x1f8] sm:$0xff] %v174
    %263 = vst [vmem:[#allocation5 + $0x200] sm:$0xff] %v175
    %264 = vst [vmem:[#allocation5 + $0x208] sm:$0xff] %v176
    %265 = vst [vmem:[#allocation5 + $0x210] sm:$0xff] %v177
    %266 = vst [vmem:[#allocation5 + $0x218] sm:$0xff] %v178
    %267 = vst [vmem:[#allocation5 + $0x220] sm:$0xff] %v179
    %268 = vst [vmem:[#allocation5 + $0x228] sm:$0xff] %v180
    %269 = vst [vmem:[#allocation5 + $0x230] sm:$0xff] %v181
    %270 = vst [vmem:[#allocation5 + $0x238] sm:$0xff] %v182
    %271 = vst [vmem:[#allocation5 + $0x240] sm:$0xff] %v183
    %272 = vst [vmem:[#allocation5 + $0x248] sm:$0xff] %v184
    %273 = vst [vmem:[#allocation5 + $0x250] sm:$0xff] %v185
    %274 = vst [vmem:[#allocation5 + $0x258] sm:$0xff] %v186
    %275 = vst [vmem:[#allocation5 + $0x260] sm:$0xff] %v187
    %276 = vst [vmem:[#allocation5 + $0x268] sm:$0xff] %v188
    %277 = vst [vmem:[#allocation5 + $0x270] sm:$0xff] %v189
    %278 = vst [vmem:[#allocation5 + $0x278] sm:$0xff] %v190
    %279 = vst [vmem:[#allocation5 + $0x280] sm:$0x7] %v191
    %280 = vst [vmem:[#allocation5 + $0x288] sm:$0x7] %v192
    %281 = vst [vmem:[#allocation5 + $0x290] sm:$0x7] %v193
    %282 = vst [vmem:[#allocation5 + $0x298] sm:$0x7] %v194
    %283 = vst [vmem:[#allocation5 + $0x2a0] sm:$0x7] %v195
    %284 = vst [vmem:[#allocation5 + $0x2a8] sm:$0x7] %v196
    %285 = vst [vmem:[#allocation5 + $0x2b0] sm:$0x7] %v197
    %286 = vst [vmem:[#allocation5 + $0x2b8] sm:$0x7] %v198
    // Predicated region
    $region10: #{tpu_custom_call.1} parent=1 // pred_check
      _
    $region11: #{tpu_custom_call.1} parent=1 // pred_check_branch
      %288 = sbr.rel (0) target = $region13
    $region12: #{tpu_custom_call.1} parent=1 // pred_region
      %s290 = ssub.s32 11264, 11264
      %291 = vsyncadd [#allocation4], %s290
      %s292 = sshll.u32 [#allocation5], 4
      %s293 = int_to_ptr.vmem [resolvable:$true] %s292
      %298 = dma.vmem_to_hbm [thread:$0]  %s293, 11264, %s1, [#allocation4], 1024, 1024, 64
    $region13: #{tpu_custom_call.1} parent=1 // pred_fallthru
      _
    // Predicated region
    $region14: #{tpu_custom_call.1} parent=1 // pred_check
      _
    $region15: #{tpu_custom_call.1} parent=1 // pred_check_branch
      %300 = sbr.rel (0) target = $region17
    $region16: #{tpu_custom_call.1} parent=1 // pred_region
      %301 = dma.done [#allocation4], 11264
    $region17: #{tpu_custom_call.1} parent=1 // pred_fallthru
      _
    %302 = vsyncpa [#allocation3], 1
    %303 = vsyncpa [#allocation4], 1

</llo_original>
